<compile_context>
chip_gen: v7x
topology: tpu7x:2x2x1
jax: 0.10.0
libtpu: 0.0.40
codegen_flags: <defaults>
</compile_context>

<pallas_src>
import functools

import jax
import jax.numpy as jnp
from jax.experimental import pallas as pl
from jax.experimental.pallas import tpu as pltpu


def _round_up(a: int, b: int) -> int:
    return (a + b - 1) // b * b


def bow_kernel(x_ref, w1_ref, b1_ref, w2_ref, b2_ref, o_ref, acc_ref, *, num_labels):
    """Grid = (batch_tiles, vocab_tiles); the vocab axis (innermost) is a reduction."""
    k = pl.program_id(1)

    # ----- linear1 partial sums: (TB, TV) @ (TV, H), accumulated in f32 -----
    @pl.when(k == 0)
    def _():
        acc_ref[...] = jnp.zeros_like(acc_ref)

    acc_ref[...] += jnp.dot(
        x_ref[...], w1_ref[...], preferred_element_type=jnp.float32
    )

    # ----- finalize on the last vocab tile -----
    @pl.when(k == pl.num_programs(1) - 1)
    def _():
        h = acc_ref[...] + b1_ref[...]  # bias add in f32

        # nn.Dropout in eval() is the identity.
        # TODO(synk): training-mode dropout (pltpu.prng_* Bernoulli mask + 1/(1-p) scale).

        # ----- linear2: (TB, H) @ (H, LP) + (1, LP) -----
        logits = jnp.dot(
            h.astype(w2_ref.dtype), w2_ref[...], preferred_element_type=jnp.float32
        )
        logits = logits + b2_ref[...]

        # Mask label-padding lanes (output padded to a lane-dense width of 128).
        col = jax.lax.broadcasted_iota(jnp.int32, logits.shape, 1)
        logits = jnp.where(col < num_labels, logits, -jnp.inf)

        # ----- numerically-stable log_softmax over the label axis -----
        m = jnp.max(logits, axis=-1, keepdims=True)
        shifted = logits - m
        lse = jnp.log(jnp.sum(jnp.exp(shifted), axis=-1, keepdims=True))
        o_ref[...] = (shifted - lse).astype(o_ref.dtype)


def bow_classifier2(x, w1, b1, w2, b2, *, tb=256, tv=2048,
                    compute_dtype=jnp.bfloat16):
    """x: (B, V); w1: (V, H); b1: (1, H); w2: (H, L); b2: (1, L) -> (B, L) f32.

    Weights are pre-transposed to (in_features, out_features).
    """
    B, V = x.shape
    H = w1.shape[1]
    L = w2.shape[1]
    assert w1.shape == (V, H) and b1.shape == (1, H)
    assert w2.shape == (H, L) and b2.shape == (1, L)

    # Lane-dense padded label width (avoids 4/128-lane masked stores).
    LP = _round_up(max(L, 1), 128)

    # Tile sizes, clamped to the (padded) problem size for tiny inputs.
    TB = min(tb, _round_up(B, 8))
    TV = min(tv, _round_up(V, 128))
    B_pad = _round_up(B, TB)
    V_pad = _round_up(V, TV)

    # Streaming operands in bf16 (halves HBM traffic; MXU accumulates in f32).
    x_p = jnp.pad(x.astype(compute_dtype), ((0, B_pad - B), (0, V_pad - V)))
    w1_p = jnp.pad(w1.astype(compute_dtype), ((0, V_pad - V), (0, 0)))
    b1_p = b1.astype(jnp.float32)
    w2_p = jnp.pad(w2.astype(compute_dtype), ((0, 0), (0, LP - L)))
    b2_p = jnp.pad(b2.astype(jnp.float32), ((0, 0), (0, LP - L)))

    grid = (B_pad // TB, V_pad // TV)

    out = pl.pallas_call(
        functools.partial(bow_kernel, num_labels=L),
        out_shape=jax.ShapeDtypeStruct((B_pad, LP), jnp.float32),
        grid_spec=pltpu.PrefetchScalarGridSpec(
            num_scalar_prefetch=0,
            grid=grid,
            in_specs=[
                pl.BlockSpec((TB, TV), lambda i, k: (i, k)),   # x: streamed over B and V
                pl.BlockSpec((TV, H), lambda i, k: (k, 0)),    # w1: streamed over V
                pl.BlockSpec((1, H), lambda i, k: (0, 0)),     # b1: resident
                pl.BlockSpec((H, LP), lambda i, k: (0, 0)),    # w2: resident
                pl.BlockSpec((1, LP), lambda i, k: (0, 0)),    # b2: resident
            ],
            out_specs=pl.BlockSpec((TB, LP), lambda i, k: (i, 0)),
            scratch_shapes=[pltpu.VMEM((TB, H), jnp.float32)],
        ),
        compiler_params=pltpu.CompilerParams(
            # Batch axis shards across TensorCores (v7x megacore); vocab axis is the reduction.
            dimension_semantics=("parallel", "arbitrary"),
            vmem_limit_bytes=48 * 1024 * 1024,
        ),
    )(x_p, w1_p, b1_p, w2_p, b2_p)

    return out[:B, :L]


def _reference(x, w1, b1, w2, b2, compute_dtype=jnp.bfloat16):
    # Mirrors the kernel's bf16-input / f32-accumulate matmuls.
    h = jnp.dot(x.astype(compute_dtype), w1.astype(compute_dtype),
                preferred_element_type=jnp.float32) + b1
    logits = jnp.dot(h.astype(compute_dtype), w2.astype(compute_dtype),
                     preferred_element_type=jnp.float32) + b2
    return jax.nn.log_softmax(logits, axis=1)


if __name__ == "__main__":
    # Module hyperparameters (small, consistent with the forward pass).
    num_labels = 4
    vocab_size = 128
    hidden = 64
    batch = 8

    key = jax.random.PRNGKey(0)
    kx, kw1, kb1, kw2, kb2 = jax.random.split(key, 5)

    # Deterministic parameter init mimicking nn.Linear (uniform +-1/sqrt(fan_in)),
    # stored pre-transposed as (in_features, out_features).
    bound1 = 1.0 / jnp.sqrt(vocab_size)
    w1 = jax.random.uniform(kw1, (vocab_size, hidden), jnp.float32, -bound1, bound1)
    b1 = jax.random.uniform(kb1, (1, hidden), jnp.float32, -bound1, bound1)

    bound2 = 1.0 / jnp.sqrt(hidden)
    w2 = jax.random.uniform(kw2, (hidden, num_labels), jnp.float32, -bound2, bound2)
    b2 = jax.random.uniform(kb2, (1, num_labels), jnp.float32, -bound2, bound2)

    # Bag-of-words input counts.
    x = jax.random.uniform(kx, (batch, vocab_size), jnp.float32, 0.0, 3.0)

    out = bow_classifier2(x, w1, b1, w2, b2)
    out = jax.block_until_ready(out)

    ref = _reference(x, w1, b1, w2, b2)
    assert out.shape == (batch, num_labels)
    assert jnp.allclose(out, ref, atol=2e-3, rtol=2e-3), "mismatch vs reference"

    print("KERNEL_OK")
</pallas_src>

<mosaic_0001>
module attributes {stable_mosaic.version = 11 : i64} {
  func.func @bow_kernel(%arg0: i32, %arg1: i32, %arg2: memref<8x128xbf16, #tpu.memory_space<vmem>>, %arg3: memref<128x64xbf16, #tpu.memory_space<vmem>>, %arg4: memref<1x64xf32, #tpu.memory_space<vmem>>, %arg5: memref<64x128xbf16, #tpu.memory_space<vmem>>, %arg6: memref<1x128xf32, #tpu.memory_space<vmem>>, %arg7: memref<8x128xf32, #tpu.memory_space<vmem>>, %arg8: memref<8x64xf32, #tpu.memory_space<vmem>>) attributes {dimension_semantics = [#tpu.dimension_semantics<parallel>, #tpu.dimension_semantics<arbitrary>], iteration_bounds = array<i64: 1, 1>, scalar_prefetch = 0 : i64, scratch_operands = 1 : i64, tpu.core_type = #tpu.core_type<tc>, window_params = [{transform_indices = @transform_0, window_bounds = array<i64: 8, 128>}, {transform_indices = @transform_1, window_bounds = array<i64: 128, 64>}, {pipeline_mode = #tpu.pipeline_mode<synchronous>, transform_indices = @transform_2, window_bounds = array<i64: 1, 64>}, {pipeline_mode = #tpu.pipeline_mode<synchronous>, transform_indices = @transform_3, window_bounds = array<i64: 64, 128>}, {pipeline_mode = #tpu.pipeline_mode<synchronous>, transform_indices = @transform_4, window_bounds = array<i64: 1, 128>}, {transform_indices = @transform_5, window_bounds = array<i64: 8, 128>}]} {
    %c0_i32 = arith.constant 0 : i32
    %0 = arith.cmpi eq, %arg1, %c0_i32 : i32
    %1 = arith.extui %0 : i1 to i32
    %c0_i32_0 = arith.constant 0 : i32
    %2 = arith.cmpi ne, %1, %c0_i32_0 : i32
    scf.if %2 {
      %cst_10 = arith.constant 0.000000e+00 : f32
      %12 = vector.broadcast %cst_10 : f32 to vector<8x64xf32>
      %c0_11 = arith.constant 0 : index
      %c0_12 = arith.constant 0 : index
      %13 = vector.load %arg8[%c0_11, %c0_12] : memref<8x64xf32, #tpu.memory_space<vmem>>, vector<8x64xf32>
      tpu.vector_store %arg8[%c0_11, %c0_12], %12 {strides = array<i32>} : memref<8x64xf32, #tpu.memory_space<vmem>>, vector<8x64xf32>,
    } else {
    }
    %c0 = arith.constant 0 : index
    %c0_1 = arith.constant 0 : index
    %3 = vector.load %arg8[%c0, %c0_1] : memref<8x64xf32, #tpu.memory_space<vmem>>, vector<8x64xf32>
    %c0_2 = arith.constant 0 : index
    %c0_3 = arith.constant 0 : index
    %4 = vector.load %arg2[%c0_2, %c0_3] : memref<8x128xbf16, #tpu.memory_space<vmem>>, vector<8x128xbf16>
    %c0_4 = arith.constant 0 : index
    %c0_5 = arith.constant 0 : index
    %5 = vector.load %arg3[%c0_4, %c0_5] : memref<128x64xbf16, #tpu.memory_space<vmem>>, vector<128x64xbf16>
    %cst = arith.constant dense<0.000000e+00> : vector<8x64xf32>
    %6 = tpu.matmul %4, %5, %cst {dimension_numbers = #tpu.dot_dimension_numbers<[1], [0], [0], [1], [0, 0, 1, 1], [], []>} : vector<8x128xbf16>, vector<128x64xbf16>, vector<8x64xf32> -> vector<8x64xf32>
    %7 = arith.addf %3, %6 : vector<8x64xf32>
    %c0_6 = arith.constant 0 : index
    %c0_7 = arith.constant 0 : index
    %8 = vector.load %arg8[%c0_6, %c0_7] : memref<8x64xf32, #tpu.memory_space<vmem>>, vector<8x64xf32>
    tpu.vector_store %arg8[%c0_6, %c0_7], %7 {strides = array<i32>} : memref<8x64xf32, #tpu.memory_space<vmem>>, vector<8x64xf32>,
    %c0_i32_8 = arith.constant 0 : i32
    %9 = arith.cmpi eq, %arg1, %c0_i32_8 : i32
    %10 = arith.extui %9 : i1 to i32
    %c0_i32_9 = arith.constant 0 : i32
    %11 = arith.cmpi ne, %10, %c0_i32_9 : i32
    scf.if %11 {
      %c0_10 = arith.constant 0 : index
      %c0_11 = arith.constant 0 : index
      %12 = vector.load %arg8[%c0_10, %c0_11] : memref<8x64xf32, #tpu.memory_space<vmem>>, vector<8x64xf32>
      %c0_12 = arith.constant 0 : index
      %c0_13 = arith.constant 0 : index
      %13 = vector.load %arg4[%c0_12, %c0_13] : memref<1x64xf32, #tpu.memory_space<vmem>>, vector<1x64xf32>
      %14 = vector.broadcast %13 : vector<1x64xf32> to vector<8x64xf32>
      %15 = arith.addf %12, %14 : vector<8x64xf32>
      %16 = arith.truncf %15 : vector<8x64xf32> to vector<8x64xbf16>
      %c0_14 = arith.constant 0 : index
      %c0_15 = arith.constant 0 : index
      %17 = vector.load %arg5[%c0_14, %c0_15] : memref<64x128xbf16, #tpu.memory_space<vmem>>, vector<64x128xbf16>
      %cst_16 = arith.constant dense<0.000000e+00> : vector<8x128xf32>
      %18 = tpu.matmul %16, %17, %cst_16 {dimension_numbers = #tpu.dot_dimension_numbers<[1], [0], [0], [1], [0, 0, 1, 1], [], []>} : vector<8x64xbf16>, vector<64x128xbf16>, vector<8x128xf32> -> vector<8x128xf32>
      %c0_17 = arith.constant 0 : index
      %c0_18 = arith.constant 0 : index
      %19 = vector.load %arg6[%c0_17, %c0_18] : memref<1x128xf32, #tpu.memory_space<vmem>>, vector<1x128xf32>
      %20 = vector.broadcast %19 : vector<1x128xf32> to vector<8x128xf32>
      %21 = arith.addf %18, %20 : vector<8x128xf32>
      %22 = tpu.iota {dimensions = array<i32: 1>} : vector<8x128xi32>
      %c4_i32 = arith.constant 4 : i32
      %23 = vector.broadcast %c4_i32 : i32 to vector<8x128xi32>
      %24 = arith.cmpi slt, %22, %23 : vector<8x128xi32>
      %cst_19 = arith.constant 0xFF800000 : f32
      %25 = vector.broadcast %cst_19 : f32 to vector<8x128xf32>
      %26 = arith.select %24, %21, %25 : vector<8x128xi1>, vector<8x128xf32>
      %cst_20 = arith.constant dense<0xFF800000> : vector<8xf32>
      %27 = vector.multi_reduction <maximumf>, %26, %cst_20 [1] : vector<8x128xf32> to vector<8xf32>
      %28 = vector.shape_cast %27 : vector<8xf32> to vector<8x1xf32>
      %29 = vector.broadcast %28 : vector<8x1xf32> to vector<8x128xf32>
      %30 = arith.subf %26, %29 : vector<8x128xf32>
      %31 = math.exp %30 : vector<8x128xf32>
      %cst_21 = arith.constant dense<0.000000e+00> : vector<8xf32>
      %32 = vector.multi_reduction <add>, %31, %cst_21 [1] : vector<8x128xf32> to vector<8xf32>
      %33 = vector.shape_cast %32 : vector<8xf32> to vector<8x1xf32>
      %34 = math.log %33 : vector<8x1xf32>
      %35 = vector.broadcast %34 : vector<8x1xf32> to vector<8x128xf32>
      %36 = arith.subf %30, %35 : vector<8x128xf32>
      %c0_22 = arith.constant 0 : index
      %c0_23 = arith.constant 0 : index
      %37 = vector.load %arg7[%c0_22, %c0_23] : memref<8x128xf32, #tpu.memory_space<vmem>>, vector<8x128xf32>
      tpu.vector_store %arg7[%c0_22, %c0_23], %36 {strides = array<i32>} : memref<8x128xf32, #tpu.memory_space<vmem>>, vector<8x128xf32>,
    } else {
    }
    return
  }
  func.func @transform_0(%arg0: i32, %arg1: i32) -> (i32, i32) {
    %c0_i32 = arith.constant 0 : i32
    return %arg0, %arg1 : i32, i32
  }
  func.func @transform_1(%arg0: i32, %arg1: i32) -> (i32, i32) {
    %c0_i32 = arith.constant 0 : i32
    %c0_i32_0 = arith.constant 0 : i32
    return %arg1, %c0_i32 : i32, i32
  }
  func.func @transform_2(%arg0: i32, %arg1: i32) -> (i32, i32) {
    %c0_i32 = arith.constant 0 : i32
    %c0_i32_0 = arith.constant 0 : i32
    %c0_i32_1 = arith.constant 0 : i32
    return %c0_i32, %c0_i32_0 : i32, i32
  }
  func.func @transform_3(%arg0: i32, %arg1: i32) -> (i32, i32) {
    %c0_i32 = arith.constant 0 : i32
    %c0_i32_0 = arith.constant 0 : i32
    %c0_i32_1 = arith.constant 0 : i32
    return %c0_i32, %c0_i32_0 : i32, i32
  }
  func.func @transform_4(%arg0: i32, %arg1: i32) -> (i32, i32) {
    %c0_i32 = arith.constant 0 : i32
    %c0_i32_0 = arith.constant 0 : i32
    %c0_i32_1 = arith.constant 0 : i32
    return %c0_i32, %c0_i32_0 : i32, i32
  }
  func.func @transform_5(%arg0: i32, %arg1: i32) -> (i32, i32) {
    %c0_i32 = arith.constant 0 : i32
    %c0_i32_0 = arith.constant 0 : i32
    return %arg0, %c0_i32 : i32, i32
  }
}

</mosaic_0001>

<llo_original>
// kernel: tpu_custom_call.1
$region0: #{tpu_custom_call.1}
  #allocation0 [shape = 'u32[]', space=smem, size = 0x4, offset = 0x4, fixed_abs, tag = 'smem constant byte address 0x4 - core index']
  #allocation1 [shape = 'u32[144,128]{1,0:T(1,128)}', space=vmem, size = 0x12000, scoped, tag = 'internal scratch']
  #allocation2 [shape = 'f32[8,64]{1,0:T(8,128)}', space=vmem, size = 0x1000, scoped, tag = 'scratch operand']
  %s0 = inlined_call_operand.vmem [shape: bf16[8,128], index: 0, kind: input, shape index: {}]
  %s1 = inlined_call_operand.vmem [shape: bf16[128,64], index: 1, kind: input, shape index: {}]
  %s2 = inlined_call_operand.vmem [shape: f32[1,64], index: 2, kind: input, shape index: {}]
  %s3 = inlined_call_operand.vmem [shape: bf16[64,128], index: 3, kind: input, shape index: {}]
  %s4 = inlined_call_operand.vmem [shape: f32[1,128], index: 4, kind: input, shape index: {}]
  %s5 = inlined_call_operand.hbm [shape: f32[8,128], index: 5, kind: output, shape index: {}]
  %s6 = sld [smem:[#allocation0]]
  $region38: #{tpu_custom_call.1} parent=0
    _
  %s8 = ssub.s32 1, %s6
  %s9 = scalar_select 0, %s8, %s6
  $region1: #{tpu_custom_call.1} parent=0
    #allocation3 [shape = 'u8[4096]{0}', space=vmem, size = 0x1000, scoped, tag = 'output window, operand 0, single buffered']
    #allocation4 [shape = 's32[1]{0}', space=sflag, size = 0x4, scoped, tag = 'scoped memory for tpu_custom_call.1']
    %10 = vsyncpa [#allocation4], 0
    // Predicated region
    $region2: #{tpu_custom_call.1} parent=1 // pred_check
      _
    $region3: #{tpu_custom_call.1} parent=1 // pred_check_branch
      %12 = sbr.rel (0) target = $region5
    $region4: #{tpu_custom_call.1} parent=1 // pred_region
      _
    $region5: #{tpu_custom_call.1} parent=1 // pred_fallthru
      _
    // Predicated region
    $region6: #{tpu_custom_call.1} parent=1 // pred_check
      _
    $region7: #{tpu_custom_call.1} parent=1 // pred_check_branch
      %14 = sbr.rel (0) target = $region9
    $region8: #{tpu_custom_call.1} parent=1 // pred_region
      _
    $region9: #{tpu_custom_call.1} parent=1 // pred_fallthru
      _
    // Predicated region
    $region10: #{tpu_custom_call.1} parent=1 // pred_check
      _
    $region11: #{tpu_custom_call.1} parent=1 // pred_check_branch
      %16 = sbr.rel (0) target = $region13
    $region12: #{tpu_custom_call.1} parent=1 // pred_region
      _
    $region13: #{tpu_custom_call.1} parent=1 // pred_fallthru
      _
    // Predicated region
    $region14: #{tpu_custom_call.1} parent=1 // pred_check
      _
    $region15: #{tpu_custom_call.1} parent=1 // pred_check_branch
      %18 = sbr.rel (0) target = $region17
    $region16: #{tpu_custom_call.1} parent=1 // pred_region
      _
    $region17: #{tpu_custom_call.1} parent=1 // pred_fallthru
      _
    // Predicated region
    $region18: #{tpu_custom_call.1} parent=1 // pred_check
      _
    $region19: #{tpu_custom_call.1} parent=1 // pred_check_branch
      %20 = sbr.rel (0) target = $region21
    $region20: #{tpu_custom_call.1} parent=1 // pred_region
      _
    $region21: #{tpu_custom_call.1} parent=1 // pred_fallthru
      _
    %p22 = scmp.eq.s32.totalorder 0, 0
    // Predicated region
    $region22: #{tpu_custom_call.1} parent=1 // pred_check
      %p23 = pneg %p22
    $region23: #{tpu_custom_call.1} parent=1 // pred_check_branch
      %25 = sbr.rel (%p23) target = $region25
    $region24: #{tpu_custom_call.1} parent=1 // pred_region
      %vm26 = vcmask 523264
      %27 = vst.msk [vmem:[#allocation2] sm:$0xff] %vm26, 0.0
    $region25: #{tpu_custom_call.1} parent=1 // pred_fallthru
      _
    %v28 = vld [vmem:[#allocation2] sm:$0xff]
    %v29 = vld [vmem:[%s0] sm:$0xf]
    %v30 = vld [vmem:[%s1] sm:$0xf]
    %v31 = vld [vmem:[%s1 + $0x4] sm:$0xf]
    %v32 = vld [vmem:[%s1 + $0x8] sm:$0xf]
    %v33 = vld [vmem:[%s1 + $0xc] sm:$0xf]
    %v34 = vld [vmem:[%s1 + $0x10] sm:$0xf]
    %v35 = vld [vmem:[%s1 + $0x14] sm:$0xf]
    %v36 = vld [vmem:[%s1 + $0x18] sm:$0xf]
    %v37 = vld [vmem:[%s1 + $0x1c] sm:$0xf]
    %v38 = vld [vmem:[%s1 + $0x20] sm:$0xf]
    %v39 = vld [vmem:[%s1 + $0x24] sm:$0xf]
    %v40 = vld [vmem:[%s1 + $0x28] sm:$0xf]
    %v41 = vld [vmem:[%s1 + $0x2c] sm:$0xf]
    %v42 = vld [vmem:[%s1 + $0x30] sm:$0xf]
    %v43 = vld [vmem:[%s1 + $0x34] sm:$0xf]
    %v44 = vld [vmem:[%s1 + $0x38] sm:$0xf]
    %v45 = vld [vmem:[%s1 + $0x3c] sm:$0xf]
    %v62 = vunpack.c.l.b16 %v30
    %v63 = vunpack.c.l.b16 %v31
    %v64 = vunpack.c.l.b16 %v32
    %v65 = vunpack.c.l.b16 %v33
    %v66 = vunpack.c.l.b16 %v34
    %v67 = vunpack.c.l.b16 %v35
    %v68 = vunpack.c.l.b16 %v36
    %v69 = vunpack.c.l.b16 %v37
    %v70 = vunpack.c.l.b16 %v38
    %v71 = vunpack.c.l.b16 %v39
    %v72 = vunpack.c.l.b16 %v40
    %v73 = vunpack.c.l.b16 %v41
    %v74 = vunpack.c.l.b16 %v42
    %v75 = vunpack.c.l.b16 %v43
    %v76 = vunpack.c.l.b16 %v44
    %v77 = vunpack.c.l.b16 %v45
    %v78 = vpack.c.b16 %v63, %v62
    %v79 = vpack.c.b16 %v65, %v64
    %v80 = vpack.c.b16 %v67, %v66
    %v81 = vpack.c.b16 %v69, %v68
    %v82 = vpack.c.b16 %v71, %v70
    %v83 = vpack.c.b16 %v73, %v72
    %v84 = vpack.c.b16 %v75, %v74
    %v85 = vpack.c.b16 %v77, %v76
    %94 = vmatprep.subr.bf16.mxu0 0
    %95 = vmatpush1.bf16.msra.mxu0 %v78
    %96 = vmatprep.subr.bf16.mxu0 0
    %97 = vmatpush1.bf16.msra.mxu0 %v79
    %98 = vmatprep.subr.bf16.mxu0 0
    %99 = vmatpush1.bf16.msra.mxu0 %v80
    %100 = vmatprep.subr.bf16.mxu0 0
    %101 = vmatpush1.bf16.msra.mxu0 %v81
    %102 = vmatprep.subr.bf16.mxu0 0
    %103 = vmatpush1.bf16.msra.mxu0 %v82
    %104 = vmatprep.subr.bf16.mxu0 0
    %105 = vmatpush1.bf16.msra.mxu0 %v83
    %106 = vmatprep.subr.bf16.mxu0 0
    %107 = vmatpush1.bf16.msra.mxu0 %v84
    %108 = vmatprep.subr.bf16.mxu0 0
    %109 = vmatpush1.bf16.msra.mxu0 %v85
    %110 = vmatprep.subr.bf16.mxu0 0
    %111 = vmatpush1.bf16.msra.mxu0 0
    %112 = vmatprep.subr.bf16.mxu0 0
    %113 = vmatpush1.bf16.msra.mxu0 0
    %114 = vmatprep.subr.bf16.mxu0 0
    %115 = vmatpush1.bf16.msra.mxu0 0
    %116 = vmatprep.subr.bf16.mxu0 0
    %117 = vmatpush1.bf16.msra.mxu0 0
    %118 = vmatprep.subr.bf16.mxu0 0
    %119 = vmatpush1.bf16.msra.mxu0 0
    %120 = vmatprep.subr.bf16.mxu0 0
    %121 = vmatpush1.bf16.msra.mxu0 0
    %122 = vmatprep.subr.bf16.mxu0 0
    %123 = vmatpush1.bf16.msra.mxu0 0
    %124 = vmatprep.subr.bf16.mxu0 0
    %125 = vmatpush1.bf16.msra.mxu0 0
    %126 = vmatprep.mubr.bf16.mxu0 0
    %127 = vmatmul.mubr.bf16.gmra.mrb[0].mxu0 %v29
    %v128 = vpop.f32.mrb[0].mxu0
    %v129 = vadd.f32 0.0, %v128
    %v130 = vpop.f32.mrb[0].mxu0
    %v131 = vpop.f32.mrb[0].mxu0
    %v132 = vpop.f32.mrb[0].mxu0
    %133 = vdwg.mxu0
    %v134 = vadd.f32 %v28, %v129
    %vm135 = vcmask 523264
    %136 = vst.msk [vmem:[#allocation2] sm:$0xff] %vm135, %v134
    // Predicated region
    $region26: #{tpu_custom_call.1} parent=1 // pred_check
      %p137 = pneg %p22
    $region27: #{tpu_custom_call.1} parent=1 // pred_check_branch
      %139 = sbr.rel (%p137) target = $region29
    $region28: #{tpu_custom_call.1} parent=1 // pred_region
      %v140 = vld [vmem:[#allocation2] sm:$0xff]
      %v141 = vld [vmem:[%s2] sm:$0x1]
      %v143 = vlaneseq
      %v144 = vshrl.u32 %v143, 7
      %v145 = vsub.s32 0, %v144
      %v146 = vrot.slane %v141, %v145
      %v148 = vadd.f32 %v140, %v146
      %v149 = vpack.c.bf16 %v148, %v148
      %v150 = vld [vmem:[%s3] sm:$0xf]
      %v151 = vld [vmem:[%s3 + $0x4] sm:$0xf]
      %v152 = vld [vmem:[%s3 + $0x8] sm:$0xf]
      %v153 = vld [vmem:[%s3 + $0xc] sm:$0xf]
      %v154 = vld [vmem:[%s3 + $0x10] sm:$0xf]
      %v155 = vld [vmem:[%s3 + $0x14] sm:$0xf]
      %v156 = vld [vmem:[%s3 + $0x18] sm:$0xf]
      %v157 = vld [vmem:[%s3 + $0x1c] sm:$0xf]
      %v158 = vld [vmem:[%s4] sm:$0x1]
      %v160 = vlaneseq
      %v161 = vshrl.u32 %v160, 7
      %v162 = vsub.s32 0, %v161
      %v163 = vrot.slane %v158, %v162
      %v173 = vunpack.c.l.b16 %v150
      %v174 = vunpack.c.l.b16 %v151
      %v175 = vunpack.c.l.b16 %v152
      %v176 = vunpack.c.l.b16 %v153
      %v177 = vunpack.c.l.b16 %v154
      %v178 = vunpack.c.l.b16 %v155
      %v179 = vunpack.c.l.b16 %v156
      %v180 = vunpack.c.l.b16 %v157
      %v181 = vpack.c.b16 %v174, %v173
      %v182 = vpack.c.b16 %v176, %v175
      %v183 = vpack.c.b16 %v178, %v177
      %v184 = vpack.c.b16 %v180, %v179
      %v190 = vsel %vm135, %v149, 0
      %192 = vmatprep.subr.bf16.mxu0 0
      %193 = vmatpush1.bf16.msra.mxu0 %v181
      %194 = vmatprep.subr.bf16.mxu0 0
      %195 = vmatpush1.bf16.msra.mxu0 %v182
      %196 = vmatprep.subr.bf16.mxu0 0
      %197 = vmatpush1.bf16.msra.mxu0 %v183
      %198 = vmatprep.subr.bf16.mxu0 0
      %199 = vmatpush1.bf16.msra.mxu0 %v184
      %200 = vmatprep.subr.bf16.mxu0 0
      %201 = vmatpush1.bf16.msra.mxu0 0
      %202 = vmatprep.subr.bf16.mxu0 0
      %203 = vmatpush1.bf16.msra.mxu0 0
      %204 = vmatprep.subr.bf16.mxu0 0
      %205 = vmatpush1.bf16.msra.mxu0 0
      %206 = vmatprep.subr.bf16.mxu0 0
      %207 = vmatpush1.bf16.msra.mxu0 0
      %208 = vmatprep.subr.bf16.mxu0 0
      %209 = vmatpush1.bf16.msra.mxu0 0
      %210 = vmatprep.subr.bf16.mxu0 0
      %211 = vmatpush1.bf16.msra.mxu0 0
      %212 = vmatprep.subr.bf16.mxu0 0
      %213 = vmatpush1.bf16.msra.mxu0 0
      %214 = vmatprep.subr.bf16.mxu0 0
      %215 = vmatpush1.bf16.msra.mxu0 0
      %216 = vmatprep.subr.bf16.mxu0 0
      %217 = vmatpush1.bf16.msra.mxu0 0
      %218 = vmatprep.subr.bf16.mxu0 0
      %219 = vmatpush1.bf16.msra.mxu0 0
      %220 = vmatprep.subr.bf16.mxu0 0
      %221 = vmatpush1.bf16.msra.mxu0 0
      %222 = vmatprep.subr.bf16.mxu0 0
      %223 = vmatpush1.bf16.msra.mxu0 0
      %224 = vmatprep.mubr.bf16.mxu0 0
      %225 = vmatmul.mubr.bf16.gmra.mrb[0].mxu0 %v190
      %v226 = vpop.f32.mrb[0].mxu0
      %v227 = vadd.f32 %v163, %v226
      %v228 = vpop.f32.mrb[0].mxu0
      %v229 = vpop.f32.mrb[0].mxu0
      %v230 = vpop.f32.mrb[0].mxu0
      %231 = vdwg.mxu0
      %v232 = vlaneseq
      %v233 = vand.u32 %v232, 127
      %vm234 = vcmp.lt.s32.totalorder %v233, 4
      %v235 = vsel %vm234, %v227, -inf
      %236 = vmax.xlane.f32.xlu0 %v235
      %v237 = vpop.xlane.xlu0 %236
      %v238 = vsub.f32 %v235, %v237
      %v239 = vmul.f32 %v238, 1.442695
      %v240 = vpow.pop %v239
      %241 = vadd.xlane.f32.xlu0 %v240
      %v242 = vpop.xlane.xlu0 %241
      %v243 = vlog2.pop %v242
      %v244 = vmul.f32 %v243, 0.6931472
      %v245 = vsub.f32 %v238, %v244
      %246 = vst [vmem:[#allocation3] sm:$0xff] %v245
    $region29: #{tpu_custom_call.1} parent=1 // pred_fallthru
      _
    // Predicated region
    $region30: #{tpu_custom_call.1} parent=1 // pred_check
      _
    $region31: #{tpu_custom_call.1} parent=1 // pred_check_branch
      %248 = sbr.rel (0) target = $region33
    $region32: #{tpu_custom_call.1} parent=1 // pred_region
      %s250 = ssub.s32 128, 128
      %251 = vsyncadd [#allocation4], %s250
      %s253 = sshll.u32 [#allocation3], 4
      %s254 = int_to_ptr.vmem [resolvable:$true] %s253
      %256 = dma.vmem_to_hbm [thread:$0]  %s254, 128, %s5, [#allocation4]
    $region33: #{tpu_custom_call.1} parent=1 // pred_fallthru
      _
    // Predicated region
    $region34: #{tpu_custom_call.1} parent=1 // pred_check
      _
    $region35: #{tpu_custom_call.1} parent=1 // pred_check_branch
      %258 = sbr.rel (0) target = $region37
    $region36: #{tpu_custom_call.1} parent=1 // pred_region
      %259 = dma.done [#allocation4], 128
    $region37: #{tpu_custom_call.1} parent=1 // pred_fallthru
      _
    %260 = vsyncpa [#allocation4], 1

</llo_original>
